<compile_context>
chip_gen: v5e
topology: v5e:2x2
jax: 0.10.0
libtpu: 0.0.40
codegen_flags: <defaults>
</compile_context>

<pallas_src>
import jax
import jax.numpy as jnp
from jax.experimental import pallas as pl
from jax.experimental.pallas import tpu as pltpu

LANE = 128      # feature dims padded to this (lane width)
SUBLANE = 8     # node-dim granularity


def _round_up(x, m):
    return ((x + m - 1) // m) * m


def _pad2d(x, rows, cols):
    r, c = x.shape
    return jnp.pad(x, ((0, rows - r), (0, cols - c)))


def _node_tiling(n):
    """Padded node count and (tm, tk) tiles.

    Large graphs: 256-row x 512-K tiles (K multiple of 256 for the 2x256x256
    MXU on v6e/v7x); a bf16 A tile is only 256 KiB so double-buffered tiles
    stay far below v7x's 64 MiB VMEM.  Small graphs: one full-extent tile.
    """
    if n >= 512:
        n_pad = _round_up(n, 512)
        return n_pad, 256, 512
    n_pad = _round_up(n, SUBLANE)
    return n_pad, n_pad, n_pad


def gcn_layer_kernel(a_ref, h_ref, wt_ref, b_ref, o_ref, acc_ref):
    """One GCN layer, tiled over (row tile i, contraction tile k).

    a_ref  : [tm, tk]       bf16 adjacency tile (A[i, u] = #edges u->i)
    h_ref  : [tk, F_in]     bf16 node-feature tile
    wt_ref : [F_in, F_out]  f32 linear weight (pre-transposed), resident
    b_ref  : [1, F_out]     f32 bias, resident
    o_ref  : [tm, F_out]    f32 output tile (written on last k)
    acc_ref: [tm, F_in]     f32 aggregation accumulator (scratch)
    """
    k = pl.program_id(1)

    @pl.when(k == 0)
    def _init():
        acc_ref[...] = jnp.zeros_like(acc_ref)

    # Message-passing partial sum: acc += A_tile @ H_tile  (MXU, bf16 in / f32 acc)
    acc_ref[...] += jnp.dot(a_ref[...], h_ref[...],
                            preferred_element_type=jnp.float32)

    @pl.when(k == pl.num_programs(1) - 1)
    def _finalize():
        # Linear (small f32 MXU matmul) + bias, then tanh (EUP), all in f32.
        z = jnp.dot(acc_ref[...], wt_ref[...],
                    preferred_element_type=jnp.float32) + b_ref[...]
        o_ref[...] = jnp.tanh(z).astype(o_ref.dtype)


def gcn_layer(adj_bf16, h, wt, b2d, *, tm, tk):
    """Apply one GCN layer. Inputs already padded; wt is [F_in_pad, F_out_pad]."""
    n_pad = adj_bf16.shape[0]
    f_in = h.shape[1]
    f_out = wt.shape[1]
    h_bf16 = h.astype(jnp.bfloat16)   # MXU input only; epilogue stays f32

    grid = (n_pad // tm, n_pad // tk)

    # Rough VMEM budget: double-buffered tiles + resident weights + accumulator.
    vmem_bytes = (2 * tm * tk * 2            # A tiles (bf16)
                  + 2 * tk * f_in * 2        # H tiles (bf16)
                  + 2 * tm * f_out * 4       # output tiles (f32)
                  + 2 * f_in * f_out * 4     # Wt
                  + 2 * f_out * 4            # bias
                  + tm * f_in * 4)           # accumulator scratch
    vmem_limit = int(min(48 << 20, max(32 << 20, 4 * vmem_bytes)))

    return pl.pallas_call(
        gcn_layer_kernel,
        out_shape=jax.ShapeDtypeStruct((n_pad, f_out), jnp.float32),
        grid_spec=pltpu.PrefetchScalarGridSpec(
            num_scalar_prefetch=0,
            grid=grid,
            in_specs=[
                pl.BlockSpec((tm, tk), lambda i, k: (i, k)),        # A
                pl.BlockSpec((tk, f_in), lambda i, k: (k, 0)),      # H
                pl.BlockSpec((f_in, f_out), lambda i, k: (0, 0)),   # Wt (resident)
                pl.BlockSpec((1, f_out), lambda i, k: (0, 0)),      # bias (resident)
            ],
            out_specs=pl.BlockSpec((tm, f_out), lambda i, k: (i, 0)),
            scratch_shapes=[pltpu.VMEM((tm, f_in), jnp.float32)],
        ),
        compiler_params=pltpu.CompilerParams(
            dimension_semantics=("parallel", "arbitrary"),
            vmem_limit_bytes=vmem_limit,
        ),
    )(adj_bf16, h_bf16, wt, b2d)


@jax.jit
def gcn_model_forward(adj, emb, weights, biases, src, dst):
    """Full GCNModel forward: stack of GCN layers, then gather src/dst rows."""
    n_nodes, in_feats = emb.shape
    out_feats = weights[0].shape[0]

    n_pad, tm, tk = _node_tiling(n_nodes)
    f_in_pad = _round_up(in_feats, LANE)
    f_out_pad = _round_up(out_feats, LANE)

    # Adjacency cast to bf16 once (exact while integer edge multiplicities < 256).
    adj_p = _pad2d(adj, n_pad, n_pad).astype(jnp.bfloat16)
    h = _pad2d(emb, n_pad, f_in_pad)

    # Hoisted out of the per-layer loop: transpose + pad weights / bias once.
    # (After lane padding every layer is 128 -> 128, so the "apply the linear
    #  first when F_out < F_in" reorder would be a no-op here.)
    wts, b2ds = [], []
    fin = f_in_pad
    for w, b in zip(weights, biases):
        wts.append(_pad2d(w.T, fin, f_out_pad))
        b2ds.append(_pad2d(b.reshape(1, -1), 1, f_out_pad))
        fin = f_out_pad

    # TODO(synk): when padded H fits VMEM, fuse all layers into a single kernel
    # (weights resident, H ping-ponged between two VMEM scratch buffers) to drop
    # the per-layer HBM round trips of H.
    for wt, b2d in zip(wts, b2ds):
        h = gcn_layer(adj_p, h, wt, b2d, tm=tm, tk=tk)

    h = h[:n_nodes, :out_feats]
    return h[src], h[dst]   # emb[src], emb[dst] — plain-JAX gather (glue)


def build_adjacency(n_nodes, edge_src, edge_dst):
    """A[i, u] = number of edges u -> i (DGL copy_src + sum aggregation)."""
    adj = jnp.zeros((n_nodes, n_nodes), jnp.float32)
    return adj.at[edge_dst, edge_src].add(1.0)


def init_params(key, in_feats, out_feats, n_nodes, n_layers=3):
    """Deterministic parameter init matching the module's shapes."""
    keys = jax.random.split(key, 1 + 2 * n_layers)
    emb = jax.random.normal(keys[0], (n_nodes, in_feats), jnp.float32)
    weights, biases = [], []
    fin = in_feats
    for layer in range(n_layers):
        kw, kb = keys[1 + 2 * layer], keys[2 + 2 * layer]
        bound = 1.0 / (fin ** 0.5)   # nn.Linear default init range
        w = jax.random.uniform(kw, (out_feats, fin), jnp.float32, -bound, bound)
        b = jax.random.uniform(kb, (out_feats,), jnp.float32, -bound, bound)
        weights.append(w)
        biases.append(b)
        fin = out_feats
    return emb, weights, biases


if __name__ == "__main__":
    # Small, module-consistent shapes.
    n_nodes, in_feats, out_feats, n_layers = 32, 16, 32, 3
    n_edges = 64

    key = jax.random.PRNGKey(0)
    k_param, k_src, k_dst = jax.random.split(key, 3)

    emb, weights, biases = init_params(k_param, in_feats, out_feats, n_nodes, n_layers)

    # Deterministic synthetic graph (edge list) + query src/dst node indices.
    edge_src = jax.random.randint(k_src, (n_edges,), 0, n_nodes)
    edge_dst = jax.random.randint(k_dst, (n_edges,), 0, n_nodes)
    adj = build_adjacency(n_nodes, edge_src, edge_dst)
    # bf16 adjacency is exact only while edge multiplicities stay < 256.
    assert float(jnp.max(adj)) < 256.0

    src = edge_src   # score the same edges, as in link prediction
    dst = edge_dst

    emb_src, emb_dst = gcn_model_forward(adj, emb, weights, biases, src, dst)
    jax.block_until_ready((emb_src, emb_dst))

    # Reference 1: mirrors the kernel's bf16 MXU inputs (tighter tolerance).
    hi = jax.lax.Precision.HIGHEST
    h_mirror = emb
    for w, b in zip(weights, biases):
        agg = jnp.dot(adj.astype(jnp.bfloat16), h_mirror.astype(jnp.bfloat16),
                      preferred_element_type=jnp.float32, precision=hi)
        h_mirror = jnp.tanh(jnp.dot(agg, w.T, precision=hi) + b)

    # Reference 2: pure f32 module semantics (loose tolerance: bf16 MXU inputs).
    h_f32 = emb
    for w, b in zip(weights, biases):
        h_f32 = jnp.tanh(jnp.dot(jnp.dot(adj, h_f32, precision=hi), w.T,
                                 precision=hi) + b)

    assert emb_src.shape == (n_edges, out_feats)
    assert emb_dst.shape == (n_edges, out_feats)
    assert jnp.allclose(emb_src, h_mirror[src], atol=5e-2, rtol=5e-2)
    assert jnp.allclose(emb_dst, h_mirror[dst], atol=5e-2, rtol=5e-2)
    assert jnp.allclose(emb_src, h_f32[src], atol=1e-1, rtol=1e-1)
    assert jnp.allclose(emb_dst, h_f32[dst], atol=1e-1, rtol=1e-1)

    print("KERNEL_OK")
</pallas_src>

<mosaic_0001>
module attributes {stable_mosaic.version = 11 : i64} {
  func.func @gcn_layer_kernel(%arg0: i32, %arg1: i32, %arg2: memref<32x32xbf16, #tpu.memory_space<vmem>>, %arg3: memref<32x128xbf16, #tpu.memory_space<vmem>>, %arg4: memref<128x128xf32, #tpu.memory_space<vmem>>, %arg5: memref<1x128xf32, #tpu.memory_space<vmem>>, %arg6: memref<32x128xf32, #tpu.memory_space<vmem>>, %arg7: memref<32x128xf32, #tpu.memory_space<vmem>>) attributes {dimension_semantics = [#tpu.dimension_semantics<parallel>, #tpu.dimension_semantics<arbitrary>], iteration_bounds = array<i64: 1, 1>, scalar_prefetch = 0 : i64, scratch_operands = 1 : i64, tpu.core_type = #tpu.core_type<tc>, window_params = [{transform_indices = @transform_0, window_bounds = array<i64: 32, 32>}, {transform_indices = @transform_1, window_bounds = array<i64: 32, 128>}, {pipeline_mode = #tpu.pipeline_mode<synchronous>, transform_indices = @transform_2, window_bounds = array<i64: 128, 128>}, {pipeline_mode = #tpu.pipeline_mode<synchronous>, transform_indices = @transform_3, window_bounds = array<i64: 1, 128>}, {transform_indices = @transform_4, window_bounds = array<i64: 32, 128>}]} {
    %c0_i32 = arith.constant 0 : i32
    %0 = arith.cmpi eq, %arg1, %c0_i32 : i32
    %1 = arith.extui %0 : i1 to i32
    %c0_i32_0 = arith.constant 0 : i32
    %2 = arith.cmpi ne, %1, %c0_i32_0 : i32
    scf.if %2 {
      %cst_10 = arith.constant 0.000000e+00 : f32
      %12 = vector.broadcast %cst_10 : f32 to vector<32x128xf32>
      %c0_11 = arith.constant 0 : index
      %c0_12 = arith.constant 0 : index
      %13 = vector.load %arg7[%c0_11, %c0_12] : memref<32x128xf32, #tpu.memory_space<vmem>>, vector<32x128xf32>
      tpu.vector_store %arg7[%c0_11, %c0_12], %12 {strides = array<i32>} : memref<32x128xf32, #tpu.memory_space<vmem>>, vector<32x128xf32>,
    } else {
    }
    %c0 = arith.constant 0 : index
    %c0_1 = arith.constant 0 : index
    %3 = vector.load %arg7[%c0, %c0_1] : memref<32x128xf32, #tpu.memory_space<vmem>>, vector<32x128xf32>
    %c0_2 = arith.constant 0 : index
    %c0_3 = arith.constant 0 : index
    %4 = vector.load %arg2[%c0_2, %c0_3] : memref<32x32xbf16, #tpu.memory_space<vmem>>, vector<32x32xbf16>
    %c0_4 = arith.constant 0 : index
    %c0_5 = arith.constant 0 : index
    %5 = vector.load %arg3[%c0_4, %c0_5] : memref<32x128xbf16, #tpu.memory_space<vmem>>, vector<32x128xbf16>
    %cst = arith.constant dense<0.000000e+00> : vector<32x128xf32>
    %6 = tpu.matmul %4, %5, %cst {dimension_numbers = #tpu.dot_dimension_numbers<[1], [0], [0], [1], [0, 0, 1, 1], [], []>} : vector<32x32xbf16>, vector<32x128xbf16>, vector<32x128xf32> -> vector<32x128xf32>
    %7 = arith.addf %3, %6 : vector<32x128xf32>
    %c0_6 = arith.constant 0 : index
    %c0_7 = arith.constant 0 : index
    %8 = vector.load %arg7[%c0_6, %c0_7] : memref<32x128xf32, #tpu.memory_space<vmem>>, vector<32x128xf32>
    tpu.vector_store %arg7[%c0_6, %c0_7], %7 {strides = array<i32>} : memref<32x128xf32, #tpu.memory_space<vmem>>, vector<32x128xf32>,
    %c0_i32_8 = arith.constant 0 : i32
    %9 = arith.cmpi eq, %arg1, %c0_i32_8 : i32
    %10 = arith.extui %9 : i1 to i32
    %c0_i32_9 = arith.constant 0 : i32
    %11 = arith.cmpi ne, %10, %c0_i32_9 : i32
    scf.if %11 {
      %c0_10 = arith.constant 0 : index
      %c0_11 = arith.constant 0 : index
      %12 = vector.load %arg7[%c0_10, %c0_11] : memref<32x128xf32, #tpu.memory_space<vmem>>, vector<32x128xf32>
      %c0_12 = arith.constant 0 : index
      %c0_13 = arith.constant 0 : index
      %13 = vector.load %arg4[%c0_12, %c0_13] : memref<128x128xf32, #tpu.memory_space<vmem>>, vector<128x128xf32>
      %cst_14 = arith.constant dense<0.000000e+00> : vector<32x128xf32>
      %14 = tpu.matmul %12, %13, %cst_14 {dimension_numbers = #tpu.dot_dimension_numbers<[1], [0], [0], [1], [0, 0, 1, 1], [], []>} : vector<32x128xf32>, vector<128x128xf32>, vector<32x128xf32> -> vector<32x128xf32>
      %c0_15 = arith.constant 0 : index
      %c0_16 = arith.constant 0 : index
      %15 = vector.load %arg5[%c0_15, %c0_16] : memref<1x128xf32, #tpu.memory_space<vmem>>, vector<1x128xf32>
      %16 = vector.broadcast %15 : vector<1x128xf32> to vector<32x128xf32>
      %17 = arith.addf %14, %16 : vector<32x128xf32>
      %18 = math.tanh %17 : vector<32x128xf32>
      %c0_17 = arith.constant 0 : index
      %c0_18 = arith.constant 0 : index
      %19 = vector.load %arg6[%c0_17, %c0_18] : memref<32x128xf32, #tpu.memory_space<vmem>>, vector<32x128xf32>
      tpu.vector_store %arg6[%c0_17, %c0_18], %18 {strides = array<i32>} : memref<32x128xf32, #tpu.memory_space<vmem>>, vector<32x128xf32>,
    } else {
    }
    return
  }
  func.func @transform_0(%arg0: i32, %arg1: i32) -> (i32, i32) {
    %c0_i32 = arith.constant 0 : i32
    return %arg0, %arg1 : i32, i32
  }
  func.func @transform_1(%arg0: i32, %arg1: i32) -> (i32, i32) {
    %c0_i32 = arith.constant 0 : i32
    %c0_i32_0 = arith.constant 0 : i32
    return %arg1, %c0_i32 : i32, i32
  }
  func.func @transform_2(%arg0: i32, %arg1: i32) -> (i32, i32) {
    %c0_i32 = arith.constant 0 : i32
    %c0_i32_0 = arith.constant 0 : i32
    %c0_i32_1 = arith.constant 0 : i32
    return %c0_i32, %c0_i32_0 : i32, i32
  }
  func.func @transform_3(%arg0: i32, %arg1: i32) -> (i32, i32) {
    %c0_i32 = arith.constant 0 : i32
    %c0_i32_0 = arith.constant 0 : i32
    %c0_i32_1 = arith.constant 0 : i32
    return %c0_i32, %c0_i32_0 : i32, i32
  }
  func.func @transform_4(%arg0: i32, %arg1: i32) -> (i32, i32) {
    %c0_i32 = arith.constant 0 : i32
    %c0_i32_0 = arith.constant 0 : i32
    return %arg0, %c0_i32 : i32, i32
  }
}

</mosaic_0001>

<llo_original>
// kernel: gcn_model_forward.3
$region0: #{gcn_model_forward.3}
  #allocation0 [shape = 'u32[]', space=smem, size = 0x4, offset = 0x4, fixed_abs, tag = 'smem constant byte address 0x4 - core index']
  #allocation1 [shape = 'u32[72,128]{1,0:T(1,128)}', space=vmem, size = 0x9000, scoped, tag = 'internal scratch']
  #allocation2 [shape = 'f32[32,128]{1,0:T(8,128)}', space=vmem, size = 0x4000, scoped, tag = 'scratch operand']
  %s0 = inlined_call_operand.vmem [shape: bf16[32,32], index: 0, kind: input, shape index: {}]
  %s1 = inlined_call_operand.vmem [shape: bf16[32,128], index: 1, kind: input, shape index: {}]
  %s2 = inlined_call_operand.vmem [shape: f32[128,128], index: 2, kind: input, shape index: {}]
  %s3 = inlined_call_operand.vmem [shape: f32[1,128], index: 3, kind: input, shape index: {}]
  %s4 = inlined_call_operand.vmem [shape: f32[32,128], index: 4, kind: output, shape index: {}]
  %s5 = sld [smem:[#allocation0]]
  $region34: #{gcn_model_forward.3} parent=0
    _
  %s7 = ssub.s32 1, %s5
  %s8 = scalar_select 0, %s7, %s5
  // Predicated region
  $region2: #{gcn_model_forward.3} parent=0 // pred_check
    _
  $region3: #{gcn_model_forward.3} parent=0 // pred_check_branch
    %10 = sbr.rel (0) target = $region5
  $region4: #{gcn_model_forward.3} parent=0 // pred_region
    _
  $region5: #{gcn_model_forward.3} parent=0 // pred_fallthru
    _
  // Predicated region
  $region6: #{gcn_model_forward.3} parent=0 // pred_check
    _
  $region7: #{gcn_model_forward.3} parent=0 // pred_check_branch
    %12 = sbr.rel (0) target = $region9
  $region8: #{gcn_model_forward.3} parent=0 // pred_region
    _
  $region9: #{gcn_model_forward.3} parent=0 // pred_fallthru
    _
  // Predicated region
  $region10: #{gcn_model_forward.3} parent=0 // pred_check
    _
  $region11: #{gcn_model_forward.3} parent=0 // pred_check_branch
    %14 = sbr.rel (0) target = $region13
  $region12: #{gcn_model_forward.3} parent=0 // pred_region
    _
  $region13: #{gcn_model_forward.3} parent=0 // pred_fallthru
    _
  // Predicated region
  $region14: #{gcn_model_forward.3} parent=0 // pred_check
    _
  $region15: #{gcn_model_forward.3} parent=0 // pred_check_branch
    %16 = sbr.rel (0) target = $region17
  $region16: #{gcn_model_forward.3} parent=0 // pred_region
    _
  $region17: #{gcn_model_forward.3} parent=0 // pred_fallthru
    _
  %p18 = scmp.eq.s32.totalorder 0, 0
  // Predicated region
  $region18: #{gcn_model_forward.3} parent=0 // pred_check
    %p19 = pneg %p18
  $region19: #{gcn_model_forward.3} parent=0 // pred_check_branch
    %21 = sbr.rel (%p19) target = $region21
  $region20: #{gcn_model_forward.3} parent=0 // pred_region
    %22 = vst [vmem:[#allocation2] sm:$0xff] 0.0
    %23 = vst [vmem:[#allocation2 + $0x8] sm:$0xff] 0.0
    %24 = vst [vmem:[#allocation2 + $0x10] sm:$0xff] 0.0
    %25 = vst [vmem:[#allocation2 + $0x18] sm:$0xff] 0.0
  $region21: #{gcn_model_forward.3} parent=0 // pred_fallthru
    _
  %v26 = vld [vmem:[#allocation2] sm:$0xff]
  %v27 = vld [vmem:[#allocation2 + $0x8] sm:$0xff]
  %v28 = vld [vmem:[#allocation2 + $0x10] sm:$0xff]
  %v29 = vld [vmem:[#allocation2 + $0x18] sm:$0xff]
  %v30 = vld [vmem:[%s0] sm:$0xf]
  %v31 = vld [vmem:[%s0 + $0x4] sm:$0xf]
  %v32 = vld [vmem:[%s0 + $0x8] sm:$0xf]
  %v33 = vld [vmem:[%s0 + $0xc] sm:$0xf]
  %v34 = vld [vmem:[%s1] sm:$0xf]
  %v35 = vld [vmem:[%s1 + $0x4] sm:$0xf]
  %v36 = vld [vmem:[%s1 + $0x8] sm:$0xf]
  %v37 = vld [vmem:[%s1 + $0xc] sm:$0xf]
  %v42 = vunpack.c.l.b16 %v30
  %v43 = vunpack.c.l.b16 %v31
  %v44 = vunpack.c.l.b16 %v32
  %v45 = vunpack.c.l.b16 %v33
  %v46 = vpack.c.b16 %v43, %v42
  %v47 = vpack.c.b16 %v45, %v44
  %v52 = vunpack.c.l.b16 %v34
  %v53 = vunpack.c.l.b16 %v35
  %v54 = vunpack.c.l.b16 %v36
  %v55 = vunpack.c.l.b16 %v37
  %v56 = vpack.c.b16 %v53, %v52
  %v57 = vpack.c.b16 %v55, %v54
  %vm60 = vcmask 261120
  %v62 = vsel %vm60, %v46, 0
  %v65 = vsel %vm60, %v47, 0
  %67 = vmatpush.bf16.msra.mxu0 0
  %68 = vmatpush.bf16.msra.mxu0 0
  %69 = vmatpush.bf16.msra.mxu0 0
  %70 = vmatpush.bf16.msra.mxu0 0
  %71 = vmatpush.bf16.msra.mxu0 0
  %72 = vmatpush.bf16.msra.mxu0 0
  %73 = vmatpush.bf16.msra.mxu0 %v57
  %74 = vmatpush.bf16.msra.mxu0 %v56
  %75 = vmatmul.bf16.gmra.mxu0 %v62
  %v76 = vpop.f32.mrf.mxu0
  %v77 = vadd.f32 0.0, %v76
  %v78 = vpop.f32.mrf.mxu0
  %v79 = vadd.f32 0.0, %v78
  %80 = vmatmul.bf16.gmra.mxu0 %v65
  %v81 = vpop.f32.mrf.mxu0
  %v82 = vadd.f32 0.0, %v81
  %v83 = vpop.f32.mrf.mxu0
  %v84 = vadd.f32 0.0, %v83
  %85 = vdwg.mxu0
  %v86 = vadd.f32 %v26, %v77
  %v87 = vadd.f32 %v27, %v79
  %v88 = vadd.f32 %v28, %v82
  %v89 = vadd.f32 %v29, %v84
  %90 = vst [vmem:[#allocation2] sm:$0xff] %v86
  %91 = vst [vmem:[#allocation2 + $0x8] sm:$0xff] %v87
  %92 = vst [vmem:[#allocation2 + $0x10] sm:$0xff] %v88
  %93 = vst [vmem:[#allocation2 + $0x18] sm:$0xff] %v89
  // Predicated region
  $region22: #{gcn_model_forward.3} parent=0 // pred_check
    %p94 = pneg %p18
  $region23: #{gcn_model_forward.3} parent=0 // pred_check_branch
    %96 = sbr.rel (%p94) target = $region25
  $region24: #{gcn_model_forward.3} parent=0 // pred_region
    %v97 = vld [vmem:[#allocation2] sm:$0xff]
    %v98 = vld [vmem:[#allocation2 + $0x8] sm:$0xff]
    %v99 = vld [vmem:[#allocation2 + $0x10] sm:$0xff]
    %v100 = vld [vmem:[#allocation2 + $0x18] sm:$0xff]
    %v101 = vld [vmem:[%s2] sm:$0xff]
    %v102 = vld [vmem:[%s2 + $0x8] sm:$0xff]
    %v103 = vld [vmem:[%s2 + $0x10] sm:$0xff]
    %v104 = vld [vmem:[%s2 + $0x18] sm:$0xff]
    %v105 = vld [vmem:[%s2 + $0x20] sm:$0xff]
    %v106 = vld [vmem:[%s2 + $0x28] sm:$0xff]
    %v107 = vld [vmem:[%s2 + $0x30] sm:$0xff]
    %v108 = vld [vmem:[%s2 + $0x38] sm:$0xff]
    %v109 = vld [vmem:[%s2 + $0x40] sm:$0xff]
    %v110 = vld [vmem:[%s2 + $0x48] sm:$0xff]
    %v111 = vld [vmem:[%s2 + $0x50] sm:$0xff]
    %v112 = vld [vmem:[%s2 + $0x58] sm:$0xff]
    %v113 = vld [vmem:[%s2 + $0x60] sm:$0xff]
    %v114 = vld [vmem:[%s2 + $0x68] sm:$0xff]
    %v115 = vld [vmem:[%s2 + $0x70] sm:$0xff]
    %v116 = vld [vmem:[%s2 + $0x78] sm:$0xff]
    %v117 = vld [vmem:[%s3] sm:$0x1]
    %v119 = vperm.slane %v117, 0
    %121 = vmatpush.msra.mxu0 %v116
    %122 = vmatpush.msra.mxu0 %v115
    %123 = vmatpush.msra.mxu0 %v114
    %124 = vmatpush.msra.mxu0 %v113
    %125 = vmatpush.msra.mxu0 %v112
    %126 = vmatpush.msra.mxu0 %v111
    %127 = vmatpush.msra.mxu0 %v110
    %128 = vmatpush.msra.mxu0 %v109
    %129 = vmatpush.msra.mxu0 %v108
    %130 = vmatpush.msra.mxu0 %v107
    %131 = vmatpush.msra.mxu0 %v106
    %132 = vmatpush.msra.mxu0 %v105
    %133 = vmatpush.msra.mxu0 %v104
    %134 = vmatpush.msra.mxu0 %v103
    %135 = vmatpush.msra.mxu0 %v102
    %136 = vmatpush.msra.mxu0 %v101
    %137 = vmatmul.f32.gmra.mxu0 %v97
    %v138 = vpop.f32.mrf.mxu0
    %v139 = vadd.f32 %v119, %v138
    %140 = vmatmul.f32.gmra.mxu0 %v98
    %v141 = vpop.f32.mrf.mxu0
    %v142 = vadd.f32 %v119, %v141
    %143 = vmatmul.f32.gmra.mxu0 %v99
    %v144 = vpop.f32.mrf.mxu0
    %v145 = vadd.f32 %v119, %v144
    %146 = vmatmul.f32.gmra.mxu0 %v100
    %v147 = vpop.f32.mrf.mxu0
    %v148 = vadd.f32 %v119, %v147
    %149 = vdwg.mxu0
    %v150 = vtanh.pop %v139
    %v151 = vtanh.pop %v142
    %v152 = vtanh.pop %v145
    %v153 = vtanh.pop %v148
    %154 = vst [vmem:[%s4] sm:$0xff] %v150
    %155 = vst [vmem:[%s4 + $0x8] sm:$0xff] %v151
    %156 = vst [vmem:[%s4 + $0x10] sm:$0xff] %v152
    %157 = vst [vmem:[%s4 + $0x18] sm:$0xff] %v153
  $region25: #{gcn_model_forward.3} parent=0 // pred_fallthru
    _
  // Predicated region
  $region26: #{gcn_model_forward.3} parent=0 // pred_check
    _
  $region27: #{gcn_model_forward.3} parent=0 // pred_check_branch
    %159 = sbr.rel (0) target = $region29
  $region28: #{gcn_model_forward.3} parent=0 // pred_region
    _
  $region29: #{gcn_model_forward.3} parent=0 // pred_fallthru
    _
  // Predicated region
  $region30: #{gcn_model_forward.3} parent=0 // pred_check
    _
  $region31: #{gcn_model_forward.3} parent=0 // pred_check_branch
    %161 = sbr.rel (0) target = $region33
  $region32: #{gcn_model_forward.3} parent=0 // pred_region
    _
  $region33: #{gcn_model_forward.3} parent=0 // pred_fallthru
    _

</llo_original>
